<compile_context>
chip_gen: v7x
topology: tpu7x:2x2x1
jax: 0.10.0
libtpu: 0.0.40
codegen_flags: <defaults>
</compile_context>

<pallas_src>
import math
import functools

import jax
import jax.numpy as jnp
from jax.experimental import pallas as pl
from jax.experimental.pallas import tpu as pltpu


def _round_up(x, m):
    return ((x + m - 1) // m) * m


def _mlp_kernel(num_linear, use_layernorm, eps, *refs):
    """refs = (x_ref, w0, b0, w1, b1, ..., [gamma, beta], o_ref)."""
    x_ref = refs[0]
    o_ref = refs[-1]
    param_refs = refs[1:-1]

    if use_layernorm:
        gamma_ref, beta_ref = param_refs[-2], param_refs[-1]
        param_refs = param_refs[:-2]
    else:
        gamma_ref = beta_ref = None

    h = x_ref[...]  # bf16 activation tile
    for i in range(num_linear):
        w_ref = param_refs[2 * i]
        b_ref = param_refs[2 * i + 1]
        # bf16 x bf16 -> f32 accumulation on the MXU.
        acc = jnp.dot(h.astype(w_ref.dtype), w_ref[...],
                      preferred_element_type=jnp.float32)
        acc = acc + b_ref[...]  # bias in f32
        if i != num_linear - 1:
            acc = jnp.maximum(acc, 0.0)          # ReLU (f32, VPU)
            h = acc.astype(jnp.bfloat16)         # narrow for next MXU pass
        else:
            h = acc                              # keep final linear output in f32

    if use_layernorm:
        mean = jnp.mean(h, axis=-1, keepdims=True)
        var = jnp.mean(jnp.square(h - mean), axis=-1, keepdims=True)
        h = (h - mean) * jax.lax.rsqrt(var + eps)
        h = h * gamma_ref[...] + beta_ref[...]

    o_ref[...] = h.astype(o_ref.dtype)


def init_mlp_params(key, input_size, hidden_size, output_size, layers,
                    layernorm=True):
    """Deterministic parameter init matching MLP.reset_parameters().

    Weights are stored pre-transposed as [in_features, out_features] and cast
    to bf16 for the MXU; biases / LayerNorm affine params stay f32 as [1, F].
    """
    params = []
    for i in range(layers):
        in_f = input_size if i == 0 else hidden_size
        out_f = output_size if i == layers - 1 else hidden_size
        key, sub = jax.random.split(key)
        w = (jax.random.normal(sub, (in_f, out_f), jnp.float32)
             / math.sqrt(in_f)).astype(jnp.bfloat16)
        b = jnp.zeros((1, out_f), jnp.float32)
        params += [w, b]
    use_ln = layernorm and output_size > 1
    if use_ln:
        params += [jnp.ones((1, output_size), jnp.float32),
                   jnp.zeros((1, output_size), jnp.float32)]
    return params, use_ln


def mlp_forward(x, params, num_linear, use_layernorm, eps=1e-5, tile_n=512):
    n, in_f = x.shape
    out_f = params[2 * (num_linear - 1)].shape[1]

    # Row tile: multiple of 8 (f32/bf16 sublane packing), capped at tile_n
    # (default 512, a multiple of the 256-wide MXU M dimension).
    tile_n = min(tile_n, _round_up(n, 8))
    n_pad = _round_up(n, tile_n)
    if n_pad != n:
        x = jnp.pad(x, ((0, n_pad - n), (0, 0)))
    x = x.astype(jnp.bfloat16)

    grid = (n_pad // tile_n,)
    x_spec = pl.BlockSpec((tile_n, in_f), lambda i: (i, 0))
    # Params: whole-array blocks, constant index_map -> VMEM-resident.
    param_specs = [pl.BlockSpec(p.shape, lambda i: (0, 0)) for p in params]
    out_spec = pl.BlockSpec((tile_n, out_f), lambda i: (i, 0))

    # Advisory cost estimate for XLA's scheduler.
    flops = 0
    bytes_accessed = x.size * x.dtype.itemsize + n_pad * out_f * 4
    for i in range(num_linear):
        w, b = params[2 * i], params[2 * i + 1]
        flops += 2 * n_pad * w.shape[0] * w.shape[1]
        bytes_accessed += w.size * w.dtype.itemsize + b.size * 4
    transcendentals = n_pad if use_layernorm else 0
    if use_layernorm:
        bytes_accessed += 2 * out_f * 4
    cost = pl.CostEstimate(flops=int(flops),
                           transcendentals=int(transcendentals),
                           bytes_accessed=int(bytes_accessed))

    kernel = functools.partial(_mlp_kernel, num_linear, use_layernorm, eps)

    out = pl.pallas_call(
        kernel,
        out_shape=jax.ShapeDtypeStruct((n_pad, out_f), jnp.float32),
        grid_spec=pl.GridSpec(
            grid=grid,
            in_specs=[x_spec] + param_specs,
            out_specs=out_spec,
        ),
        compiler_params=pltpu.CompilerParams(
            dimension_semantics=("parallel",)),
        cost_estimate=cost,
    )(x, *params)

    return out[:n]


def mlp_reference(x, params, num_linear, use_layernorm, eps=1e-5):
    """Pure-JAX reference with the same bf16-matmul / f32-accumulate recipe."""
    h = x
    for i in range(num_linear):
        w, b = params[2 * i], params[2 * i + 1]
        h = jnp.dot(h.astype(jnp.bfloat16), w,
                    preferred_element_type=jnp.float32) + b
        if i != num_linear - 1:
            h = jnp.maximum(h, 0.0)
    if use_layernorm:
        gamma, beta = params[-2], params[-1]
        mean = jnp.mean(h, axis=-1, keepdims=True)
        var = jnp.mean(jnp.square(h - mean), axis=-1, keepdims=True)
        h = (h - mean) * jax.lax.rsqrt(var + eps)
        h = h * gamma + beta
    return h


if __name__ == "__main__":
    # Small shapes consistent with the module (graph-node feature MLP).
    input_size = 16
    hidden_size = 32
    output_size = 32
    layers = 3

    key = jax.random.PRNGKey(0)
    key, xkey1, xkey2 = jax.random.split(key, 3)

    params, use_ln = init_mlp_params(
        key, input_size, hidden_size, output_size, layers, layernorm=True)

    # Case 1: tiny batch (single grid step, block == full extent).
    x_small = jax.random.normal(xkey1, (16, input_size), jnp.float32)
    out_small = jax.block_until_ready(
        mlp_forward(x_small, params, layers, use_ln))
    ref_small = mlp_reference(x_small, params, layers, use_ln)
    assert out_small.shape == (16, output_size)
    assert jnp.allclose(out_small, ref_small, atol=1e-3, rtol=1e-3), \
        "mismatch vs reference (small batch)"

    # Case 2: larger batch exercising row tiling + tail padding (N % tile != 0).
    x_big = jax.random.normal(xkey2, (1000, input_size), jnp.float32)
    out_big = jax.block_until_ready(
        mlp_forward(x_big, params, layers, use_ln))
    ref_big = mlp_reference(x_big, params, layers, use_ln)
    assert out_big.shape == (1000, output_size)
    assert jnp.allclose(out_big, ref_big, atol=1e-3, rtol=1e-3), \
        "mismatch vs reference (tiled batch)"

    print("KERNEL_OK")
</pallas_src>

<mosaic_0001>
module attributes {stable_mosaic.version = 11 : i64} {
  func.func @_mlp_kernel(%arg0: i32, %arg1: memref<16x16xbf16, #tpu.memory_space<vmem>>, %arg2: memref<16x32xbf16, #tpu.memory_space<vmem>>, %arg3: memref<1x32xf32, #tpu.memory_space<vmem>>, %arg4: memref<32x32xbf16, #tpu.memory_space<vmem>>, %arg5: memref<1x32xf32, #tpu.memory_space<vmem>>, %arg6: memref<32x32xbf16, #tpu.memory_space<vmem>>, %arg7: memref<1x32xf32, #tpu.memory_space<vmem>>, %arg8: memref<1x32xf32, #tpu.memory_space<vmem>>, %arg9: memref<1x32xf32, #tpu.memory_space<vmem>>, %arg10: memref<16x32xf32, #tpu.memory_space<vmem>>) attributes {dimension_semantics = [#tpu.dimension_semantics<parallel>], iteration_bounds = array<i64: 1>, scalar_prefetch = 0 : i64, scratch_operands = 0 : i64, tpu.core_type = #tpu.core_type<tc>, window_params = [{transform_indices = @transform_0, window_bounds = array<i64: 16, 16>}, {pipeline_mode = #tpu.pipeline_mode<synchronous>, transform_indices = @transform_1, window_bounds = array<i64: 16, 32>}, {pipeline_mode = #tpu.pipeline_mode<synchronous>, transform_indices = @transform_2, window_bounds = array<i64: 1, 32>}, {pipeline_mode = #tpu.pipeline_mode<synchronous>, transform_indices = @transform_3, window_bounds = array<i64: 32, 32>}, {pipeline_mode = #tpu.pipeline_mode<synchronous>, transform_indices = @transform_4, window_bounds = array<i64: 1, 32>}, {pipeline_mode = #tpu.pipeline_mode<synchronous>, transform_indices = @transform_5, window_bounds = array<i64: 32, 32>}, {pipeline_mode = #tpu.pipeline_mode<synchronous>, transform_indices = @transform_6, window_bounds = array<i64: 1, 32>}, {pipeline_mode = #tpu.pipeline_mode<synchronous>, transform_indices = @transform_7, window_bounds = array<i64: 1, 32>}, {pipeline_mode = #tpu.pipeline_mode<synchronous>, transform_indices = @transform_8, window_bounds = array<i64: 1, 32>}, {transform_indices = @transform_9, window_bounds = array<i64: 16, 32>}]} {
    %c0 = arith.constant 0 : index
    %c0_0 = arith.constant 0 : index
    %0 = vector.load %arg1[%c0, %c0_0] : memref<16x16xbf16, #tpu.memory_space<vmem>>, vector<16x16xbf16>
    %c0_1 = arith.constant 0 : index
    %c0_2 = arith.constant 0 : index
    %1 = vector.load %arg2[%c0_1, %c0_2] : memref<16x32xbf16, #tpu.memory_space<vmem>>, vector<16x32xbf16>
    %cst = arith.constant dense<0.000000e+00> : vector<16x32xf32>
    %2 = tpu.matmul %0, %1, %cst {dimension_numbers = #tpu.dot_dimension_numbers<[1], [0], [0], [1], [0, 0, 1, 1], [], []>} : vector<16x16xbf16>, vector<16x32xbf16>, vector<16x32xf32> -> vector<16x32xf32>
    %c0_3 = arith.constant 0 : index
    %c0_4 = arith.constant 0 : index
    %3 = vector.load %arg3[%c0_3, %c0_4] : memref<1x32xf32, #tpu.memory_space<vmem>>, vector<1x32xf32>
    %4 = vector.broadcast %3 : vector<1x32xf32> to vector<16x32xf32>
    %5 = arith.addf %2, %4 : vector<16x32xf32>
    %cst_5 = arith.constant 0.000000e+00 : f32
    %6 = vector.broadcast %cst_5 : f32 to vector<16x32xf32>
    %7 = arith.maximumf %5, %6 : vector<16x32xf32>
    %8 = arith.truncf %7 : vector<16x32xf32> to vector<16x32xbf16>
    %c0_6 = arith.constant 0 : index
    %c0_7 = arith.constant 0 : index
    %9 = vector.load %arg4[%c0_6, %c0_7] : memref<32x32xbf16, #tpu.memory_space<vmem>>, vector<32x32xbf16>
    %cst_8 = arith.constant dense<0.000000e+00> : vector<16x32xf32>
    %10 = tpu.matmul %8, %9, %cst_8 {dimension_numbers = #tpu.dot_dimension_numbers<[1], [0], [0], [1], [0, 0, 1, 1], [], []>} : vector<16x32xbf16>, vector<32x32xbf16>, vector<16x32xf32> -> vector<16x32xf32>
    %c0_9 = arith.constant 0 : index
    %c0_10 = arith.constant 0 : index
    %11 = vector.load %arg5[%c0_9, %c0_10] : memref<1x32xf32, #tpu.memory_space<vmem>>, vector<1x32xf32>
    %12 = vector.broadcast %11 : vector<1x32xf32> to vector<16x32xf32>
    %13 = arith.addf %10, %12 : vector<16x32xf32>
    %cst_11 = arith.constant 0.000000e+00 : f32
    %14 = vector.broadcast %cst_11 : f32 to vector<16x32xf32>
    %15 = arith.maximumf %13, %14 : vector<16x32xf32>
    %16 = arith.truncf %15 : vector<16x32xf32> to vector<16x32xbf16>
    %c0_12 = arith.constant 0 : index
    %c0_13 = arith.constant 0 : index
    %17 = vector.load %arg6[%c0_12, %c0_13] : memref<32x32xbf16, #tpu.memory_space<vmem>>, vector<32x32xbf16>
    %cst_14 = arith.constant dense<0.000000e+00> : vector<16x32xf32>
    %18 = tpu.matmul %16, %17, %cst_14 {dimension_numbers = #tpu.dot_dimension_numbers<[1], [0], [0], [1], [0, 0, 1, 1], [], []>} : vector<16x32xbf16>, vector<32x32xbf16>, vector<16x32xf32> -> vector<16x32xf32>
    %c0_15 = arith.constant 0 : index
    %c0_16 = arith.constant 0 : index
    %19 = vector.load %arg7[%c0_15, %c0_16] : memref<1x32xf32, #tpu.memory_space<vmem>>, vector<1x32xf32>
    %20 = vector.broadcast %19 : vector<1x32xf32> to vector<16x32xf32>
    %21 = arith.addf %18, %20 : vector<16x32xf32>
    %cst_17 = arith.constant dense<0.000000e+00> : vector<16xf32>
    %22 = vector.multi_reduction <add>, %21, %cst_17 [1] : vector<16x32xf32> to vector<16xf32>
    %23 = vector.shape_cast %22 : vector<16xf32> to vector<16x1xf32>
    %cst_18 = arith.constant 3.200000e+01 : f32
    %24 = vector.broadcast %cst_18 : f32 to vector<16x1xf32>
    %25 = arith.divf %23, %24 : vector<16x1xf32>
    %26 = vector.broadcast %25 : vector<16x1xf32> to vector<16x32xf32>
    %27 = arith.subf %21, %26 : vector<16x32xf32>
    %28 = arith.mulf %27, %27 : vector<16x32xf32>
    %cst_19 = arith.constant dense<0.000000e+00> : vector<16xf32>
    %29 = vector.multi_reduction <add>, %28, %cst_19 [1] : vector<16x32xf32> to vector<16xf32>
    %30 = vector.shape_cast %29 : vector<16xf32> to vector<16x1xf32>
    %cst_20 = arith.constant 3.200000e+01 : f32
    %31 = vector.broadcast %cst_20 : f32 to vector<16x1xf32>
    %32 = arith.divf %30, %31 : vector<16x1xf32>
    %33 = vector.broadcast %25 : vector<16x1xf32> to vector<16x32xf32>
    %34 = arith.subf %21, %33 : vector<16x32xf32>
    %cst_21 = arith.constant 9.99999974E-6 : f32
    %35 = vector.broadcast %cst_21 : f32 to vector<16x1xf32>
    %36 = arith.addf %32, %35 : vector<16x1xf32>
    %37 = math.rsqrt %36 : vector<16x1xf32>
    %38 = vector.broadcast %37 : vector<16x1xf32> to vector<16x32xf32>
    %39 = arith.mulf %34, %38 : vector<16x32xf32>
    %c0_22 = arith.constant 0 : index
    %c0_23 = arith.constant 0 : index
    %40 = vector.load %arg8[%c0_22, %c0_23] : memref<1x32xf32, #tpu.memory_space<vmem>>, vector<1x32xf32>
    %41 = vector.broadcast %40 : vector<1x32xf32> to vector<16x32xf32>
    %42 = arith.mulf %39, %41 : vector<16x32xf32>
    %c0_24 = arith.constant 0 : index
    %c0_25 = arith.constant 0 : index
    %43 = vector.load %arg9[%c0_24, %c0_25] : memref<1x32xf32, #tpu.memory_space<vmem>>, vector<1x32xf32>
    %44 = vector.broadcast %43 : vector<1x32xf32> to vector<16x32xf32>
    %45 = arith.addf %42, %44 : vector<16x32xf32>
    %c0_26 = arith.constant 0 : index
    %c0_27 = arith.constant 0 : index
    %46 = vector.load %arg10[%c0_26, %c0_27] : memref<16x32xf32, #tpu.memory_space<vmem>>, vector<16x32xf32>
    tpu.vector_store %arg10[%c0_26, %c0_27], %45 {strides = array<i32>} : memref<16x32xf32, #tpu.memory_space<vmem>>, vector<16x32xf32>,
    return
  }
  func.func @transform_0(%arg0: i32) -> (i32, i32) {
    %c0_i32 = arith.constant 0 : i32
    %c0_i32_0 = arith.constant 0 : i32
    return %arg0, %c0_i32 : i32, i32
  }
  func.func @transform_1(%arg0: i32) -> (i32, i32) {
    %c0_i32 = arith.constant 0 : i32
    %c0_i32_0 = arith.constant 0 : i32
    %c0_i32_1 = arith.constant 0 : i32
    return %c0_i32, %c0_i32_0 : i32, i32
  }
  func.func @transform_2(%arg0: i32) -> (i32, i32) {
    %c0_i32 = arith.constant 0 : i32
    %c0_i32_0 = arith.constant 0 : i32
    %c0_i32_1 = arith.constant 0 : i32
    return %c0_i32, %c0_i32_0 : i32, i32
  }
  func.func @transform_3(%arg0: i32) -> (i32, i32) {
    %c0_i32 = arith.constant 0 : i32
    %c0_i32_0 = arith.constant 0 : i32
    %c0_i32_1 = arith.constant 0 : i32
    return %c0_i32, %c0_i32_0 : i32, i32
  }
  func.func @transform_4(%arg0: i32) -> (i32, i32) {
    %c0_i32 = arith.constant 0 : i32
    %c0_i32_0 = arith.constant 0 : i32
    %c0_i32_1 = arith.constant 0 : i32
    return %c0_i32, %c0_i32_0 : i32, i32
  }
  func.func @transform_5(%arg0: i32) -> (i32, i32) {
    %c0_i32 = arith.constant 0 : i32
    %c0_i32_0 = arith.constant 0 : i32
    %c0_i32_1 = arith.constant 0 : i32
    return %c0_i32, %c0_i32_0 : i32, i32
  }
  func.func @transform_6(%arg0: i32) -> (i32, i32) {
    %c0_i32 = arith.constant 0 : i32
    %c0_i32_0 = arith.constant 0 : i32
    %c0_i32_1 = arith.constant 0 : i32
    return %c0_i32, %c0_i32_0 : i32, i32
  }
  func.func @transform_7(%arg0: i32) -> (i32, i32) {
    %c0_i32 = arith.constant 0 : i32
    %c0_i32_0 = arith.constant 0 : i32
    %c0_i32_1 = arith.constant 0 : i32
    return %c0_i32, %c0_i32_0 : i32, i32
  }
  func.func @transform_8(%arg0: i32) -> (i32, i32) {
    %c0_i32 = arith.constant 0 : i32
    %c0_i32_0 = arith.constant 0 : i32
    %c0_i32_1 = arith.constant 0 : i32
    return %c0_i32, %c0_i32_0 : i32, i32
  }
  func.func @transform_9(%arg0: i32) -> (i32, i32) {
    %c0_i32 = arith.constant 0 : i32
    %c0_i32_0 = arith.constant 0 : i32
    return %arg0, %c0_i32 : i32, i32
  }
}

</mosaic_0001>

<llo_original>
// kernel: tpu_custom_call.1
$region0: #{tpu_custom_call.1}
  #allocation0 [shape = 'u32[]', space=smem, size = 0x4, offset = 0x4, fixed_abs, tag = 'smem constant byte address 0x4 - core index']
  #allocation1 [shape = 'u32[144,128]{1,0:T(1,128)}', space=vmem, size = 0x12000, scoped, tag = 'internal scratch']
  %s0 = inlined_call_operand.hbm [shape: bf16[16,16], index: 0, kind: input, shape index: {}]
  %s1 = inlined_call_operand.hbm [shape: bf16[16,32], index: 1, kind: input, shape index: {}]
  %s2 = inlined_call_operand.vmem [shape: f32[1,32], index: 2, kind: input, shape index: {}]
  %s3 = inlined_call_operand.hbm [shape: bf16[32,32], index: 3, kind: input, shape index: {}]
  %s4 = inlined_call_operand.vmem [shape: f32[1,32], index: 4, kind: input, shape index: {}]
  %s5 = inlined_call_operand.vmem [shape: bf16[32,32], index: 5, kind: input, shape index: {}]
  %s6 = inlined_call_operand.vmem [shape: f32[1,32], index: 6, kind: input, shape index: {}]
  %s7 = inlined_call_operand.vmem [shape: f32[1,32], index: 7, kind: input, shape index: {}]
  %s8 = inlined_call_operand.vmem [shape: f32[1,32], index: 8, kind: input, shape index: {}]
  %s9 = inlined_call_operand.hbm [shape: f32[16,32], index: 9, kind: output, shape index: {}]
  %s10 = sld [smem:[#allocation0]]
  $region58: #{tpu_custom_call.1} parent=0
    _
  %s12 = ssub.s32 1, %s10
  %s13 = scalar_select 0, %s12, %s10
  $region1: #{tpu_custom_call.1} parent=0
    #allocation2 [shape = 'u8[4096]{0}', space=vmem, size = 0x1000, scoped, tag = 'input window, operand 0, single buffered']
    #allocation3 [shape = 's32[1]{0}', space=sflag, size = 0x4, scoped, tag = 'scoped memory for tpu_custom_call.1']
    #allocation4 [shape = 's32[1]{0}', space=sflag, size = 0x4, scoped, tag = 'scoped memory for tpu_custom_call.1']
    #allocation5 [shape = 'u8[4096]{0}', space=vmem, size = 0x1000, scoped, tag = 'input window, operand 1, single buffered']
    #allocation6 [shape = 's32[1]{0}', space=sflag, size = 0x4, scoped, tag = 'scoped memory for tpu_custom_call.1']
    #allocation7 [shape = 'u8[8192]{0}', space=vmem, size = 0x2000, scoped, tag = 'input window, operand 3, single buffered']
    #allocation8 [shape = 'u8[8192]{0}', space=vmem, size = 0x2000, scoped, tag = 'output window, operand 0, single buffered']
    %14 = vsyncpa [#allocation3], 0
    %15 = vsyncpa [#allocation6], 0
    %16 = vsyncpa [#allocation4], 0
    // Predicated region
    $region2: #{tpu_custom_call.1} parent=1 // pred_check
      _
    $region3: #{tpu_custom_call.1} parent=1 // pred_check_branch
      %18 = sbr.rel (0) target = $region5
    $region4: #{tpu_custom_call.1} parent=1 // pred_region
      %s20 = ssub.s32 128, 128
      %21 = vsyncadd [#allocation3], %s20
      %s22 = sshll.u32 [#allocation2], 4
      %s23 = int_to_ptr.vmem [resolvable:$true] %s22
      %28 = dma.hbm_to_vmem [thread:$0]  %s0, 128, %s23, [#allocation3], 64, 64, 4
    $region5: #{tpu_custom_call.1} parent=1 // pred_fallthru
      _
    // Predicated region
    $region6: #{tpu_custom_call.1} parent=1 // pred_check
      _
    $region7: #{tpu_custom_call.1} parent=1 // pred_check_branch
      %30 = sbr.rel (0) target = $region9
    $region8: #{tpu_custom_call.1} parent=1 // pred_region
      %s32 = ssub.s32 128, 128
      %33 = vsyncadd [#allocation6], %s32
      %s34 = sshll.u32 [#allocation5], 4
      %s35 = int_to_ptr.vmem [resolvable:$true] %s34
      %40 = dma.hbm_to_vmem [thread:$0]  %s1, 128, %s35, [#allocation6], 64, 64, 4
    $region9: #{tpu_custom_call.1} parent=1 // pred_fallthru
      _
    // Predicated region
    $region10: #{tpu_custom_call.1} parent=1 // pred_check
      _
    $region11: #{tpu_custom_call.1} parent=1 // pred_check_branch
      %42 = sbr.rel (0) target = $region13
    $region12: #{tpu_custom_call.1} parent=1 // pred_region
      _
    $region13: #{tpu_custom_call.1} parent=1 // pred_fallthru
      _
    // Predicated region
    $region14: #{tpu_custom_call.1} parent=1 // pred_check
      _
    $region15: #{tpu_custom_call.1} parent=1 // pred_check_branch
      %44 = sbr.rel (0) target = $region17
    $region16: #{tpu_custom_call.1} parent=1 // pred_region
      %s46 = ssub.s32 256, 256
      %47 = vsyncadd [#allocation6], %s46
      %s48 = sshll.u32 [#allocation7], 4
      %s49 = int_to_ptr.vmem [resolvable:$true] %s48
      %54 = dma.hbm_to_vmem [thread:$0]  %s3, 256, %s49, [#allocation6], 64, 64, 4
    $region17: #{tpu_custom_call.1} parent=1 // pred_fallthru
      _
    // Predicated region
    $region18: #{tpu_custom_call.1} parent=1 // pred_check
      _
    $region19: #{tpu_custom_call.1} parent=1 // pred_check_branch
      %56 = sbr.rel (0) target = $region21
    $region20: #{tpu_custom_call.1} parent=1 // pred_region
      _
    $region21: #{tpu_custom_call.1} parent=1 // pred_fallthru
      _
    // Predicated region
    $region22: #{tpu_custom_call.1} parent=1 // pred_check
      _
    $region23: #{tpu_custom_call.1} parent=1 // pred_check_branch
      %58 = sbr.rel (0) target = $region25
    $region24: #{tpu_custom_call.1} parent=1 // pred_region
      _
    $region25: #{tpu_custom_call.1} parent=1 // pred_fallthru
      _
    // Predicated region
    $region26: #{tpu_custom_call.1} parent=1 // pred_check
      _
    $region27: #{tpu_custom_call.1} parent=1 // pred_check_branch
      %60 = sbr.rel (0) target = $region29
    $region28: #{tpu_custom_call.1} parent=1 // pred_region
      _
    $region29: #{tpu_custom_call.1} parent=1 // pred_fallthru
      _
    // Predicated region
    $region30: #{tpu_custom_call.1} parent=1 // pred_check
      _
    $region31: #{tpu_custom_call.1} parent=1 // pred_check_branch
      %62 = sbr.rel (0) target = $region33
    $region32: #{tpu_custom_call.1} parent=1 // pred_region
      _
    $region33: #{tpu_custom_call.1} parent=1 // pred_fallthru
      _
    // Predicated region
    $region34: #{tpu_custom_call.1} parent=1 // pred_check
      _
    $region35: #{tpu_custom_call.1} parent=1 // pred_check_branch
      %64 = sbr.rel (0) target = $region37
    $region36: #{tpu_custom_call.1} parent=1 // pred_region
      _
    $region37: #{tpu_custom_call.1} parent=1 // pred_fallthru
      _
    // Predicated region
    $region38: #{tpu_custom_call.1} parent=1 // pred_check
      _
    $region39: #{tpu_custom_call.1} parent=1 // pred_check_branch
      %66 = sbr.rel (0) target = $region41
    $region40: #{tpu_custom_call.1} parent=1 // pred_region
      %67 = dma.done [#allocation3], 128
    $region41: #{tpu_custom_call.1} parent=1 // pred_fallthru
      _
    // Predicated region
    $region42: #{tpu_custom_call.1} parent=1 // pred_check
      _
    $region43: #{tpu_custom_call.1} parent=1 // pred_check_branch
      %69 = sbr.rel (0) target = $region45
    $region44: #{tpu_custom_call.1} parent=1 // pred_region
      %70 = dma.done [#allocation6], 128
    $region45: #{tpu_custom_call.1} parent=1 // pred_fallthru
      _
    // Predicated region
    $region46: #{tpu_custom_call.1} parent=1 // pred_check
      _
    $region47: #{tpu_custom_call.1} parent=1 // pred_check_branch
      %72 = sbr.rel (0) target = $region49
    $region48: #{tpu_custom_call.1} parent=1 // pred_region
      %73 = dma.done [#allocation6], 256
    $region49: #{tpu_custom_call.1} parent=1 // pred_fallthru
      _
    %v75 = vld [vmem:[#allocation2] sm:$0xf]
    %v76 = vld [vmem:[#allocation2 + $0x4] sm:$0xf]
    %v77 = vld [vmem:[#allocation5] sm:$0xf]
    %v78 = vld [vmem:[#allocation5 + $0x4] sm:$0xf]
    %v79 = vld [vmem:[%s2] sm:$0x1]
    %v81 = vlaneseq
    %v82 = vshrl.u32 %v81, 7
    %v83 = vsub.s32 0, %v82
    %v84 = vrot.slane %v79, %v83
    %v88 = vunpack.c.l.b16 %v75
    %v89 = vunpack.c.l.b16 %v76
    %v90 = vpack.c.b16 %v89, %v88
    %v93 = vunpack.c.l.b16 %v77
    %v94 = vunpack.c.l.b16 %v78
    %v95 = vpack.c.b16 %v94, %v93
    %vm97 = vcmask 130048
    %v99 = vsel %vm97, %v90, 0
    %101 = vmatprep.subr.bf16.mxu0 0
    %102 = vmatpush1.bf16.msra.mxu0 %v95
    %103 = vmatprep.subr.bf16.mxu0 0
    %104 = vmatpush1.bf16.msra.mxu0 0
    %105 = vmatprep.subr.bf16.mxu0 0
    %106 = vmatpush1.bf16.msra.mxu0 0
    %107 = vmatprep.subr.bf16.mxu0 0
    %108 = vmatpush1.bf16.msra.mxu0 0
    %109 = vmatprep.subr.bf16.mxu0 0
    %110 = vmatpush1.bf16.msra.mxu0 0
    %111 = vmatprep.subr.bf16.mxu0 0
    %112 = vmatpush1.bf16.msra.mxu0 0
    %113 = vmatprep.subr.bf16.mxu0 0
    %114 = vmatpush1.bf16.msra.mxu0 0
    %115 = vmatprep.subr.bf16.mxu0 0
    %116 = vmatpush1.bf16.msra.mxu0 0
    %117 = vmatprep.subr.bf16.mxu0 0
    %118 = vmatpush1.bf16.msra.mxu0 0
    %119 = vmatprep.subr.bf16.mxu0 0
    %120 = vmatpush1.bf16.msra.mxu0 0
    %121 = vmatprep.subr.bf16.mxu0 0
    %122 = vmatpush1.bf16.msra.mxu0 0
    %123 = vmatprep.subr.bf16.mxu0 0
    %124 = vmatpush1.bf16.msra.mxu0 0
    %125 = vmatprep.subr.bf16.mxu0 0
    %126 = vmatpush1.bf16.msra.mxu0 0
    %127 = vmatprep.subr.bf16.mxu0 0
    %128 = vmatpush1.bf16.msra.mxu0 0
    %129 = vmatprep.subr.bf16.mxu0 0
    %130 = vmatpush1.bf16.msra.mxu0 0
    %131 = vmatprep.subr.bf16.mxu0 0
    %132 = vmatpush1.bf16.msra.mxu0 0
    %133 = vmatprep.mubr.bf16.mxu0 0
    %134 = vmatmul.mubr.bf16.gmra.mrb[0].mxu0 %v99
    %v135 = vpop.f32.mrb[0].mxu0
    %v136 = vadd.f32 %v84, %v135
    %v137 = vpop.f32.mrb[0].mxu0
    %v138 = vpop.f32.mrb[0].mxu0
    %v139 = vadd.f32 %v84, %v138
    %v140 = vpop.f32.mrb[0].mxu0
    %141 = vdwg.mxu0
    %v142 = vmax.f32 %v136, 0.0
    %v143 = vmax.f32 %v139, 0.0
    %v144 = vpack.c.bf16 %v143, %v142
    %v145 = vld [vmem:[#allocation7] sm:$0xf]
    %v146 = vld [vmem:[#allocation7 + $0x4] sm:$0xf]
    %v147 = vld [vmem:[#allocation7 + $0x8] sm:$0xf]
    %v148 = vld [vmem:[#allocation7 + $0xc] sm:$0xf]
    %v149 = vld [vmem:[%s4] sm:$0x1]
    %v151 = vlaneseq
    %v152 = vshrl.u32 %v151, 7
    %v153 = vsub.s32 0, %v152
    %v154 = vrot.slane %v149, %v153
    %v160 = vunpack.c.l.b16 %v145
    %v161 = vunpack.c.l.b16 %v146
    %v162 = vunpack.c.l.b16 %v147
    %v163 = vunpack.c.l.b16 %v148
    %v164 = vpack.c.b16 %v161, %v160
    %v165 = vpack.c.b16 %v163, %v162
    %vm168 = vcmask 261120
    %v170 = vsel %vm168, %v144, 0
    %172 = vmatprep.subr.bf16.mxu0 0
    %173 = vmatpush1.bf16.msra.mxu0 %v164
    %174 = vmatprep.subr.bf16.mxu0 0
    %175 = vmatpush1.bf16.msra.mxu0 %v165
    %176 = vmatprep.subr.bf16.mxu0 0
    %177 = vmatpush1.bf16.msra.mxu0 0
    %178 = vmatprep.subr.bf16.mxu0 0
    %179 = vmatpush1.bf16.msra.mxu0 0
    %180 = vmatprep.subr.bf16.mxu0 0
    %181 = vmatpush1.bf16.msra.mxu0 0
    %182 = vmatprep.subr.bf16.mxu0 0
    %183 = vmatpush1.bf16.msra.mxu0 0
    %184 = vmatprep.subr.bf16.mxu0 0
    %185 = vmatpush1.bf16.msra.mxu0 0
    %186 = vmatprep.subr.bf16.mxu0 0
    %187 = vmatpush1.bf16.msra.mxu0 0
    %188 = vmatprep.subr.bf16.mxu0 0
    %189 = vmatpush1.bf16.msra.mxu0 0
    %190 = vmatprep.subr.bf16.mxu0 0
    %191 = vmatpush1.bf16.msra.mxu0 0
    %192 = vmatprep.subr.bf16.mxu0 0
    %193 = vmatpush1.bf16.msra.mxu0 0
    %194 = vmatprep.subr.bf16.mxu0 0
    %195 = vmatpush1.bf16.msra.mxu0 0
    %196 = vmatprep.subr.bf16.mxu0 0
    %197 = vmatpush1.bf16.msra.mxu0 0
    %198 = vmatprep.subr.bf16.mxu0 0
    %199 = vmatpush1.bf16.msra.mxu0 0
    %200 = vmatprep.subr.bf16.mxu0 0
    %201 = vmatpush1.bf16.msra.mxu0 0
    %202 = vmatprep.subr.bf16.mxu0 0
    %203 = vmatpush1.bf16.msra.mxu0 0
    %204 = vmatprep.mubr.bf16.mxu0 0
    %205 = vmatmul.mubr.bf16.gmra.mrb[0].mxu0 %v170
    %v206 = vpop.f32.mrb[0].mxu0
    %v207 = vadd.f32 %v154, %v206
    %v208 = vpop.f32.mrb[0].mxu0
    %v209 = vpop.f32.mrb[0].mxu0
    %v210 = vadd.f32 %v154, %v209
    %v211 = vpop.f32.mrb[0].mxu0
    %212 = vdwg.mxu0
    %v213 = vmax.f32 %v207, 0.0
    %v214 = vmax.f32 %v210, 0.0
    %v215 = vpack.c.bf16 %v214, %v213
    %v216 = vld [vmem:[%s5] sm:$0xf]
    %v217 = vld [vmem:[%s5 + $0x4] sm:$0xf]
    %v218 = vld [vmem:[%s5 + $0x8] sm:$0xf]
    %v219 = vld [vmem:[%s5 + $0xc] sm:$0xf]
    %v220 = vld [vmem:[%s6] sm:$0x1]
    %v222 = vlaneseq
    %v223 = vshrl.u32 %v222, 7
    %v224 = vsub.s32 0, %v223
    %v225 = vrot.slane %v220, %v224
    %v231 = vunpack.c.l.b16 %v216
    %v232 = vunpack.c.l.b16 %v217
    %v233 = vunpack.c.l.b16 %v218
    %v234 = vunpack.c.l.b16 %v219
    %v235 = vpack.c.b16 %v232, %v231
    %v236 = vpack.c.b16 %v234, %v233
    %v240 = vsel %vm168, %v215, 0
    %242 = vmatprep.subr.bf16.mxu0 0
    %243 = vmatpush1.bf16.msra.mxu0 %v235
    %244 = vmatprep.subr.bf16.mxu0 0
    %245 = vmatpush1.bf16.msra.mxu0 %v236
    %246 = vmatprep.subr.bf16.mxu0 0
    %247 = vmatpush1.bf16.msra.mxu0 0
    %248 = vmatprep.subr.bf16.mxu0 0
    %249 = vmatpush1.bf16.msra.mxu0 0
    %250 = vmatprep.subr.bf16.mxu0 0
    %251 = vmatpush1.bf16.msra.mxu0 0
    %252 = vmatprep.subr.bf16.mxu0 0
    %253 = vmatpush1.bf16.msra.mxu0 0
    %254 = vmatprep.subr.bf16.mxu0 0
    %255 = vmatpush1.bf16.msra.mxu0 0
    %256 = vmatprep.subr.bf16.mxu0 0
    %257 = vmatpush1.bf16.msra.mxu0 0
    %258 = vmatprep.subr.bf16.mxu0 0
    %259 = vmatpush1.bf16.msra.mxu0 0
    %260 = vmatprep.subr.bf16.mxu0 0
    %261 = vmatpush1.bf16.msra.mxu0 0
    %262 = vmatprep.subr.bf16.mxu0 0
    %263 = vmatpush1.bf16.msra.mxu0 0
    %264 = vmatprep.subr.bf16.mxu0 0
    %265 = vmatpush1.bf16.msra.mxu0 0
    %266 = vmatprep.subr.bf16.mxu0 0
    %267 = vmatpush1.bf16.msra.mxu0 0
    %268 = vmatprep.subr.bf16.mxu0 0
    %269 = vmatpush1.bf16.msra.mxu0 0
    %270 = vmatprep.subr.bf16.mxu0 0
    %271 = vmatpush1.bf16.msra.mxu0 0
    %272 = vmatprep.subr.bf16.mxu0 0
    %273 = vmatpush1.bf16.msra.mxu0 0
    %274 = vmatprep.mubr.bf16.mxu0 0
    %275 = vmatmul.mubr.bf16.gmra.mrb[0].mxu0 %v240
    %v276 = vpop.f32.mrb[0].mxu0
    %v277 = vadd.f32 %v225, %v276
    %v278 = vpop.f32.mrb[0].mxu0
    %v279 = vpop.f32.mrb[0].mxu0
    %v280 = vadd.f32 %v225, %v279
    %v281 = vpop.f32.mrb[0].mxu0
    %282 = vdwg.mxu0
    %v283 = vsel %vm168, %v277, 0.0
    %284 = vadd.xlane.f32.xlu0 %v283
    %v285 = vpop.xlane.xlu0 %284
    %v286 = vsel %vm168, %v280, 0.0
    %287 = vadd.xlane.f32.xlu0 %v286
    %v288 = vpop.xlane.xlu0 %287
    %v289 = vrcp.pop 32.0
    %v290 = vmul.f32 %v285, %v289
    %v291 = vmul.f32 %v288, %v289
    %v292 = vsub.f32 %v277, %v290
    %v293 = vsub.f32 %v280, %v291
    %v294 = vmul.f32 %v292, %v292
    %v295 = vmul.f32 %v293, %v293
    %v296 = vsel %vm168, %v294, 0.0
    %297 = vadd.xlane.f32.xlu0 %v296
    %v298 = vpop.xlane.xlu0 %297
    %v299 = vsel %vm168, %v295, 0.0
    %300 = vadd.xlane.f32.xlu0 %v299
    %v301 = vpop.xlane.xlu0 %300
    %v302 = vmul.f32 %v298, %v289
    %v303 = vmul.f32 %v301, %v289
    %v304 = vadd.f32 %v302, 1e-05
    %v305 = vadd.f32 %v303, 1e-05
    %v306 = vrsqrt.pop %v304
    %v307 = vrsqrt.pop %v305
    %v308 = vmul.f32 %v292, %v306
    %v309 = vmul.f32 %v293, %v307
    %v310 = vld [vmem:[%s7] sm:$0x1]
    %v312 = vlaneseq
    %v313 = vshrl.u32 %v312, 7
    %v314 = vsub.s32 0, %v313
    %v315 = vrot.slane %v310, %v314
    %v317 = vmul.f32 %v308, %v315
    %v318 = vmul.f32 %v309, %v315
    %v319 = vld [vmem:[%s8] sm:$0x1]
    %v321 = vlaneseq
    %v322 = vshrl.u32 %v321, 7
    %v323 = vsub.s32 0, %v322
    %v324 = vrot.slane %v319, %v323
    %v326 = vadd.f32 %v317, %v324
    %v327 = vadd.f32 %v318, %v324
    %328 = vst.msk [vmem:[#allocation8] sm:$0xff] %vm168, %v326
    %329 = vst.msk [vmem:[#allocation8 + $0x8] sm:$0xff] %vm168, %v327
    // Predicated region
    $region50: #{tpu_custom_call.1} parent=1 // pred_check
      _
    $region51: #{tpu_custom_call.1} parent=1 // pred_check_branch
      %331 = sbr.rel (0) target = $region53
    $region52: #{tpu_custom_call.1} parent=1 // pred_region
      %s333 = ssub.s32 256, 256
      %334 = vsyncadd [#allocation4], %s333
      %s335 = sshll.u32 [#allocation8], 4
      %s336 = int_to_ptr.vmem [resolvable:$true] %s335
      %341 = dma.vmem_to_hbm [thread:$0]  %s336, 256, %s9, [#allocation4], 128, 128, 8
    $region53: #{tpu_custom_call.1} parent=1 // pred_fallthru
      _
    // Predicated region
    $region54: #{tpu_custom_call.1} parent=1 // pred_check
      _
    $region55: #{tpu_custom_call.1} parent=1 // pred_check_branch
      %343 = sbr.rel (0) target = $region57
    $region56: #{tpu_custom_call.1} parent=1 // pred_region
      %344 = dma.done [#allocation4], 256
    $region57: #{tpu_custom_call.1} parent=1 // pred_fallthru
      _
    %345 = vsyncpa [#allocation3], 1
    %346 = vsyncpa [#allocation6], 1
    %347 = vsyncpa [#allocation4], 1

</llo_original>
